<compile_context>
chip_gen: v7x
topology: tpu7x:2x2x1
jax: 0.10.0
libtpu: 0.0.40
codegen_flags: <defaults>
</compile_context>

<pallas_src>
import jax
import jax.numpy as jnp
from jax.experimental import pallas as pl
from jax.experimental.pallas import tpu as pltpu


def _round_up(x, m):
    return ((x + m - 1) // m) * m


# ---------------------------------------------------------------------------
# Kernel
# ---------------------------------------------------------------------------
def span_classifier_kernel(x_ref, w1_ref, b1_ref, w2_ref, b2_ref, out_ref):
    # x_ref : [tm, D]   f32   (cast to bf16 in-kernel)
    # w1_ref: [D, N1]   bf16  (= [Wl1 | Wr1 | pad | Wsp | pad]; reps segment 128-aligned)
    # b1_ref: [1, N1]   f32   (= [bl1 | br1 | 0 ...])
    # w2_ref: [K2, NB]  bf16  (block-diag Wl2 / Wr2 only; K2 = 128-aligned 2*inner)
    # b2_ref: [1, NB]   f32   (= [bl2 | br2 | 0 ...])
    # out_ref:[tm, N2]        (= [starts | ends | pad | reps | pad]), N2 = NB + (N1 - K2)
    k2 = w2_ref.shape[0]          # 128-aligned end of the boundary segment in h
    nb = w2_ref.shape[1]          # boundary slab width in the output

    x = x_ref[...].astype(w1_ref.dtype)            # f32 -> bf16 in VMEM (VPU, free)

    # Layer 1: all three heads fused into one wide MXU matmul, f32 accumulate.
    h = jnp.dot(x, w1_ref[...], preferred_element_type=jnp.float32) + b1_ref[...]
    h = jnp.maximum(h, 0.0)                        # f32 ReLU epilogue (VPU)

    # Layer 2: boundary scorers only (no identity block).
    boundary = jnp.dot(h[:, :k2].astype(w2_ref.dtype), w2_ref[...],
                       preferred_element_type=jnp.float32) + b2_ref[...]

    # Lane-aligned, full-width stores into the packed output slab.
    out_ref[:, :nb] = boundary.astype(out_ref.dtype)
    out_ref[:, nb:] = h[:, k2:].astype(out_ref.dtype)   # reps: direct f32 copy


# ---------------------------------------------------------------------------
# Wrapper
# ---------------------------------------------------------------------------
def _pick_vmem_limit(required_bytes):
    """Computed VMEM limit with >=25% headroom of physical VMEM (48 MiB on v7x)."""
    try:
        cap = pltpu.get_tpu_info().vmem_capacity_bytes
    except Exception:
        cap = 128 * 1024 * 1024
    ceiling = cap - cap // 4
    return int(min(max(2 * required_bytes, 16 * 1024 * 1024), ceiling))


def span_classifier_forward(x, packed, *, inner, out, argu, tm=None,
                            out_dtype=jnp.float32, single_buffer_weights=True):
    """x: [M, D] float32. packed: dict from pack_params(). Returns (starts, ends, reps)."""
    w1, b1, w2, b2 = packed["w1"], packed["b1"], packed["w2"], packed["b2"]
    M, D = x.shape
    N1 = w1.shape[1]
    k2, nb = w2.shape            # 128-aligned 2*inner, 128-aligned 2*out
    reps_pad = N1 - k2           # 128-aligned argu
    N2 = nb + reps_pad

    # Row tile: as large as reasonable (amortize ~0.35us/grid-step), multiple of 16.
    if tm is None:
        tm = min(2048, _round_up(M, 16))
    tm = max(16, _round_up(tm, 16))
    grid = (pl.cdiv(M, tm),)     # ragged last block handled by Pallas masking

    out_isz = jnp.dtype(out_dtype).itemsize
    # VMEM budget: double-buffered x/out tiles + weights + in-kernel temporaries.
    wbuf = 1 if single_buffer_weights else 2
    vmem_est = (2 * tm * D * 4                       # x tiles (f32)
                + 2 * tm * N2 * out_isz              # out tiles
                + wbuf * 2 * (D * N1 + k2 * nb)      # bf16 packed weights
                + wbuf * 4 * (N1 + nb)               # f32 biases
                + tm * N1 * 4 + tm * k2 * 2          # h (f32) + h bf16 slice
                + tm * D * 2 + tm * nb * 4)          # x bf16 + boundary f32
    vmem_limit = _pick_vmem_limit(vmem_est)

    cost = pl.CostEstimate(
        flops=2 * M * D * N1 + 2 * M * k2 * nb,
        transcendentals=0,
        bytes_accessed=(M * D * 4 + 2 * (D * N1 + k2 * nb)
                        + 4 * (N1 + nb) + M * N2 * out_isz),
    )

    def _run(pipeline_mode):
        def wspec(arr):
            kwargs = {} if pipeline_mode is None else dict(pipeline_mode=pipeline_mode)
            return pl.BlockSpec(arr.shape, lambda i, _n=arr.ndim: (0,) * _n, **kwargs)

        return pl.pallas_call(
            span_classifier_kernel,
            grid=grid,
            in_specs=[
                pl.BlockSpec((tm, D), lambda i: (i, 0)),   # x tile (streamed, f32)
                wspec(w1), wspec(b1),                      # grid-invariant params
                wspec(w2), wspec(b2),
            ],
            out_specs=pl.BlockSpec((tm, N2), lambda i: (i, 0)),
            out_shape=jax.ShapeDtypeStruct((M, N2), out_dtype),
            compiler_params=pltpu.CompilerParams(
                dimension_semantics=("parallel",),         # megacore shard on v7x
                vmem_limit_bytes=vmem_limit,
            ),
            cost_estimate=cost,
        )(x, w1, b1, w2, b2)

    if single_buffer_weights:
        try:
            # Grid-invariant weights need only one resident buffer.
            slab = jax.block_until_ready(_run(pl.Buffered(1)))
        except Exception:
            # Fallback: default double-buffering (still correct; a bit more VMEM).
            slab = _run(None)
    else:
        slab = _run(None)

    starts = slab[:, :out]
    ends = slab[:, out:2 * out]
    reps = slab[:, nb:nb + argu]
    return starts, ends, reps


# ---------------------------------------------------------------------------
# Parameter construction / packing
# ---------------------------------------------------------------------------
def xavier_uniform(key, shape):
    # shape = (fan_out, fan_in) as in torch Linear weight
    fan_out, fan_in = shape
    bound = (6.0 / (fan_in + fan_out)) ** 0.5
    return jax.random.uniform(key, shape, jnp.float32, -bound, bound)


def xavier_bias(key, size):
    # initializer_1d: view (size,) as (size,1), xavier_uniform -> bound = sqrt(6/(size+1))
    bound = (6.0 / (size + 1)) ** 0.5
    return jax.random.uniform(key, (size,), jnp.float32, -bound, bound)


def make_params(key, input_size, inner_size, output_size, argu_size):
    ks = jax.random.split(key, 9)
    # torch Linear weight is (out, in); store transposed (in, out); biases as (1, out).
    wl1 = xavier_uniform(ks[0], (inner_size, input_size)).T
    bl1 = xavier_bias(ks[1], inner_size)[None, :]
    wl2 = xavier_uniform(ks[2], (output_size, inner_size)).T
    bl2 = xavier_bias(ks[3], output_size)[None, :]
    wr1 = xavier_uniform(ks[4], (inner_size, input_size)).T
    br1 = xavier_bias(ks[5], inner_size)[None, :]
    wr2 = xavier_uniform(ks[6], (output_size, inner_size)).T
    br2 = xavier_bias(ks[7], output_size)[None, :]
    wsp = xavier_uniform(ks[8], (argu_size, input_size)).T
    return dict(wl1=wl1, bl1=bl1, wl2=wl2, bl2=bl2,
                wr1=wr1, br1=br1, wr2=wr2, br2=br2, wsp=wsp)


def pack_params(p, *, inner, out, argu, compute_dtype=jnp.bfloat16):
    """Pack 9 small parameter arrays into 2 lane-dense weight slabs + 2 f32 bias rows.

    Layer-1 columns: [Wl1 | Wr1 | pad -> 128 boundary | Wsp | pad]; the reps
    segment starts at a 128-aligned column so the kernel can copy relu'd reps
    straight to the output (no identity matmul, no extra bf16 round-trip).
    Layer-2: block-diagonal [round_up(2*inner,128), round_up(2*out,128)] with
    only the Wl2 / Wr2 blocks.
    """
    D = p["wl1"].shape[0]
    A = _round_up(2 * inner, 128)        # boundary segment width in h
    P = _round_up(argu, 128)             # reps segment width (h and out slab)
    B = _round_up(2 * out, 128)          # boundary segment width in out slab
    N1 = A + P

    w1 = jnp.zeros((D, N1), jnp.float32)
    w1 = w1.at[:, :inner].set(p["wl1"])
    w1 = w1.at[:, inner:2 * inner].set(p["wr1"])
    w1 = w1.at[:, A:A + argu].set(p["wsp"])

    b1 = jnp.zeros((1, N1), jnp.float32)
    b1 = b1.at[:, :inner].set(p["bl1"])
    b1 = b1.at[:, inner:2 * inner].set(p["br1"])
    # span_reps_0 has no bias -> stays zero.

    w2 = jnp.zeros((A, B), jnp.float32)
    w2 = w2.at[:inner, :out].set(p["wl2"])
    w2 = w2.at[inner:2 * inner, out:2 * out].set(p["wr2"])

    b2 = jnp.zeros((1, B), jnp.float32)
    b2 = b2.at[:, :out].set(p["bl2"])
    b2 = b2.at[:, out:2 * out].set(p["br2"])

    return dict(w1=w1.astype(compute_dtype), b1=b1,
                w2=w2.astype(compute_dtype), b2=b2)


# ---------------------------------------------------------------------------
# Reference (mirrors the kernel's bf16-operand / f32-accumulate precision)
# ---------------------------------------------------------------------------
def reference_forward(x, p, compute_dtype=jnp.bfloat16):
    xc = x.astype(compute_dtype)

    def dot(a, b):
        return jnp.dot(a.astype(compute_dtype), b.astype(compute_dtype),
                       preferred_element_type=jnp.float32)

    h_l = jnp.maximum(dot(xc, p["wl1"]) + p["bl1"], 0.0)
    starts = dot(h_l, p["wl2"]) + p["bl2"]
    h_r = jnp.maximum(dot(xc, p["wr1"]) + p["br1"], 0.0)
    ends = dot(h_r, p["wr2"]) + p["br2"]
    reps = jnp.maximum(dot(xc, p["wsp"]), 0.0)
    return starts, ends, reps


if __name__ == "__main__":
    key = jax.random.PRNGKey(0)
    k_x, k_p = jax.random.split(key)

    batch, seq = 2, 8
    input_size, inner_size, output_size, argu_size = 32, 16, 8, 16

    x3 = jax.random.normal(k_x, (batch, seq, input_size), jnp.float32)
    x = x3.reshape(batch * seq, input_size)          # [M, input_size]

    params = make_params(k_p, input_size, inner_size, output_size, argu_size)
    packed = pack_params(params, inner=inner_size, out=output_size, argu=argu_size)

    starts, ends, reps = span_classifier_forward(
        x, packed, inner=inner_size, out=output_size, argu=argu_size)
    jax.block_until_ready((starts, ends, reps))

    # Sanity check against a pure-JAX reference using the same bf16-operand /
    # f32-accumulate precision as the kernel (reps now take no extra round-trip).
    r_starts, r_ends, r_reps = reference_forward(x, params)
    assert jnp.allclose(starts, r_starts, atol=1e-2, rtol=1e-2)
    assert jnp.allclose(ends, r_ends, atol=1e-2, rtol=1e-2)
    assert jnp.allclose(reps, r_reps, atol=1e-2, rtol=1e-2)

    # Dropout layers use drop=0.0 -> identity, so no stochastic op is required here.
    print("KERNEL_OK")
</pallas_src>

<mosaic_0001>
module attributes {stable_mosaic.version = 11 : i64} {
  func.func @span_classifier_kernel(%arg0: i32, %arg1: memref<16x32xf32, #tpu.memory_space<vmem>>, %arg2: memref<32x256xbf16, #tpu.memory_space<vmem>>, %arg3: memref<1x256xf32, #tpu.memory_space<vmem>>, %arg4: memref<128x128xbf16, #tpu.memory_space<vmem>>, %arg5: memref<1x128xf32, #tpu.memory_space<vmem>>, %arg6: memref<16x256xf32, #tpu.memory_space<vmem>>) attributes {dimension_semantics = [#tpu.dimension_semantics<parallel>], iteration_bounds = array<i64: 1>, scalar_prefetch = 0 : i64, scratch_operands = 0 : i64, tpu.core_type = #tpu.core_type<tc>, window_params = [{transform_indices = @transform_0, window_bounds = array<i64: 16, 32>}, {pipeline_mode = #tpu.pipeline_mode<synchronous>, transform_indices = @transform_1, window_bounds = array<i64: 32, 256>}, {pipeline_mode = #tpu.pipeline_mode<synchronous>, transform_indices = @transform_2, window_bounds = array<i64: 1, 256>}, {pipeline_mode = #tpu.pipeline_mode<synchronous>, transform_indices = @transform_3, window_bounds = array<i64: 128, 128>}, {pipeline_mode = #tpu.pipeline_mode<synchronous>, transform_indices = @transform_4, window_bounds = array<i64: 1, 128>}, {transform_indices = @transform_5, window_bounds = array<i64: 16, 256>}]} {
    %c0 = arith.constant 0 : index
    %c0_0 = arith.constant 0 : index
    %0 = vector.load %arg1[%c0, %c0_0] : memref<16x32xf32, #tpu.memory_space<vmem>>, vector<16x32xf32>
    %1 = arith.truncf %0 : vector<16x32xf32> to vector<16x32xbf16>
    %c0_1 = arith.constant 0 : index
    %c0_2 = arith.constant 0 : index
    %2 = vector.load %arg2[%c0_1, %c0_2] : memref<32x256xbf16, #tpu.memory_space<vmem>>, vector<32x256xbf16>
    %cst = arith.constant dense<0.000000e+00> : vector<16x256xf32>
    %3 = tpu.matmul %1, %2, %cst {dimension_numbers = #tpu.dot_dimension_numbers<[1], [0], [0], [1], [0, 0, 1, 1], [], []>} : vector<16x32xbf16>, vector<32x256xbf16>, vector<16x256xf32> -> vector<16x256xf32>
    %c0_3 = arith.constant 0 : index
    %c0_4 = arith.constant 0 : index
    %4 = vector.load %arg3[%c0_3, %c0_4] : memref<1x256xf32, #tpu.memory_space<vmem>>, vector<1x256xf32>
    %5 = vector.broadcast %4 : vector<1x256xf32> to vector<16x256xf32>
    %6 = arith.addf %3, %5 : vector<16x256xf32>
    %cst_5 = arith.constant 0.000000e+00 : f32
    %7 = vector.broadcast %cst_5 : f32 to vector<16x256xf32>
    %8 = arith.maximumf %6, %7 : vector<16x256xf32>
    %9 = vector.extract_strided_slice %8 {offsets = [0, 0], sizes = [16, 128], strides = [1, 1]} : vector<16x256xf32> to vector<16x128xf32>
    %10 = arith.truncf %9 : vector<16x128xf32> to vector<16x128xbf16>
    %c0_6 = arith.constant 0 : index
    %c0_7 = arith.constant 0 : index
    %11 = vector.load %arg4[%c0_6, %c0_7] : memref<128x128xbf16, #tpu.memory_space<vmem>>, vector<128x128xbf16>
    %cst_8 = arith.constant dense<0.000000e+00> : vector<16x128xf32>
    %12 = tpu.matmul %10, %11, %cst_8 {dimension_numbers = #tpu.dot_dimension_numbers<[1], [0], [0], [1], [0, 0, 1, 1], [], []>} : vector<16x128xbf16>, vector<128x128xbf16>, vector<16x128xf32> -> vector<16x128xf32>
    %c0_9 = arith.constant 0 : index
    %c0_10 = arith.constant 0 : index
    %13 = vector.load %arg5[%c0_9, %c0_10] : memref<1x128xf32, #tpu.memory_space<vmem>>, vector<1x128xf32>
    %14 = vector.broadcast %13 : vector<1x128xf32> to vector<16x128xf32>
    %15 = arith.addf %12, %14 : vector<16x128xf32>
    %c0_11 = arith.constant 0 : index
    %c0_12 = arith.constant 0 : index
    %16 = vector.load %arg6[%c0_11, %c0_12] : memref<16x256xf32, #tpu.memory_space<vmem>>, vector<16x128xf32>
    tpu.vector_store %arg6[%c0_11, %c0_12], %15 {strides = array<i32>} : memref<16x256xf32, #tpu.memory_space<vmem>>, vector<16x128xf32>,
    %17 = vector.extract_strided_slice %8 {offsets = [0, 128], sizes = [16, 128], strides = [1, 1]} : vector<16x256xf32> to vector<16x128xf32>
    %c0_13 = arith.constant 0 : index
    %c128 = arith.constant 128 : index
    %18 = vector.load %arg6[%c0_13, %c128] : memref<16x256xf32, #tpu.memory_space<vmem>>, vector<16x128xf32>
    tpu.vector_store %arg6[%c0_13, %c128], %17 {strides = array<i32>} : memref<16x256xf32, #tpu.memory_space<vmem>>, vector<16x128xf32>,
    return
  }
  func.func @transform_0(%arg0: i32) -> (i32, i32) {
    %c0_i32 = arith.constant 0 : i32
    %c0_i32_0 = arith.constant 0 : i32
    return %arg0, %c0_i32 : i32, i32
  }
  func.func @transform_1(%arg0: i32) -> (i32, i32) {
    %c0_i32 = arith.constant 0 : i32
    %c0_i32_0 = arith.constant 0 : i32
    %c0_i32_1 = arith.constant 0 : i32
    return %c0_i32, %c0_i32_0 : i32, i32
  }
  func.func @transform_2(%arg0: i32) -> (i32, i32) {
    %c0_i32 = arith.constant 0 : i32
    %c0_i32_0 = arith.constant 0 : i32
    %c0_i32_1 = arith.constant 0 : i32
    return %c0_i32, %c0_i32_0 : i32, i32
  }
  func.func @transform_3(%arg0: i32) -> (i32, i32) {
    %c0_i32 = arith.constant 0 : i32
    %c0_i32_0 = arith.constant 0 : i32
    %c0_i32_1 = arith.constant 0 : i32
    return %c0_i32, %c0_i32_0 : i32, i32
  }
  func.func @transform_4(%arg0: i32) -> (i32, i32) {
    %c0_i32 = arith.constant 0 : i32
    %c0_i32_0 = arith.constant 0 : i32
    %c0_i32_1 = arith.constant 0 : i32
    return %c0_i32, %c0_i32_0 : i32, i32
  }
  func.func @transform_5(%arg0: i32) -> (i32, i32) {
    %c0_i32 = arith.constant 0 : i32
    %c0_i32_0 = arith.constant 0 : i32
    return %arg0, %c0_i32 : i32, i32
  }
}

module attributes {stable_mosaic.version = 11 : i64} {
  func.func @span_classifier_kernel(%arg0: i32, %arg1: memref<16x32xf32, #tpu.memory_space<vmem>>, %arg2: memref<32x256xbf16, #tpu.memory_space<vmem>>, %arg3: memref<1x256xf32, #tpu.memory_space<vmem>>, %arg4: memref<128x128xbf16, #tpu.memory_space<vmem>>, %arg5: memref<1x128xf32, #tpu.memory_space<vmem>>, %arg6: memref<16x256xf32, #tpu.memory_space<vmem>>) attributes {dimension_semantics = [#tpu.dimension_semantics<parallel>], iteration_bounds = array<i64: 1>, scalar_prefetch = 0 : i64, scratch_operands = 0 : i64, tpu.core_type = #tpu.core_type<tc>, window_params = [{transform_indices = @transform_0, window_bounds = array<i64: 16, 32>}, {pipeline_mode = #tpu.pipeline_mode<synchronous>, transform_indices = @transform_1, window_bounds = array<i64: 32, 256>}, {pipeline_mode = #tpu.pipeline_mode<synchronous>, transform_indices = @transform_2, window_bounds = array<i64: 1, 256>}, {pipeline_mode = #tpu.pipeline_mode<synchronous>, transform_indices = @transform_3, window_bounds = array<i64: 128, 128>}, {pipeline_mode = #tpu.pipeline_mode<synchronous>, transform_indices = @transform_4, window_bounds = array<i64: 1, 128>}, {transform_indices = @transform_5, window_bounds = array<i64: 16, 256>}]} {
    %c0 = arith.constant 0 : index
    %c0_0 = arith.constant 0 : index
    %0 = vector.load %arg1[%c0, %c0_0] : memref<16x32xf32, #tpu.memory_space<vmem>>, vector<16x32xf32>
    %1 = arith.truncf %0 : vector<16x32xf32> to vector<16x32xbf16>
    %c0_1 = arith.constant 0 : index
    %c0_2 = arith.constant 0 : index
    %2 = vector.load %arg2[%c0_1, %c0_2] : memref<32x256xbf16, #tpu.memory_space<vmem>>, vector<32x256xbf16>
    %cst = arith.constant dense<0.000000e+00> : vector<16x256xf32>
    %3 = tpu.matmul %1, %2, %cst {dimension_numbers = #tpu.dot_dimension_numbers<[1], [0], [0], [1], [0, 0, 1, 1], [], []>} : vector<16x32xbf16>, vector<32x256xbf16>, vector<16x256xf32> -> vector<16x256xf32>
    %c0_3 = arith.constant 0 : index
    %c0_4 = arith.constant 0 : index
    %4 = vector.load %arg3[%c0_3, %c0_4] : memref<1x256xf32, #tpu.memory_space<vmem>>, vector<1x256xf32>
    %5 = vector.broadcast %4 : vector<1x256xf32> to vector<16x256xf32>
    %6 = arith.addf %3, %5 : vector<16x256xf32>
    %cst_5 = arith.constant 0.000000e+00 : f32
    %7 = vector.broadcast %cst_5 : f32 to vector<16x256xf32>
    %8 = arith.maximumf %6, %7 : vector<16x256xf32>
    %9 = vector.extract_strided_slice %8 {offsets = [0, 0], sizes = [16, 128], strides = [1, 1]} : vector<16x256xf32> to vector<16x128xf32>
    %10 = arith.truncf %9 : vector<16x128xf32> to vector<16x128xbf16>
    %c0_6 = arith.constant 0 : index
    %c0_7 = arith.constant 0 : index
    %11 = vector.load %arg4[%c0_6, %c0_7] : memref<128x128xbf16, #tpu.memory_space<vmem>>, vector<128x128xbf16>
    %cst_8 = arith.constant dense<0.000000e+00> : vector<16x128xf32>
    %12 = tpu.matmul %10, %11, %cst_8 {dimension_numbers = #tpu.dot_dimension_numbers<[1], [0], [0], [1], [0, 0, 1, 1], [], []>} : vector<16x128xbf16>, vector<128x128xbf16>, vector<16x128xf32> -> vector<16x128xf32>
    %c0_9 = arith.constant 0 : index
    %c0_10 = arith.constant 0 : index
    %13 = vector.load %arg5[%c0_9, %c0_10] : memref<1x128xf32, #tpu.memory_space<vmem>>, vector<1x128xf32>
    %14 = vector.broadcast %13 : vector<1x128xf32> to vector<16x128xf32>
    %15 = arith.addf %12, %14 : vector<16x128xf32>
    %c0_11 = arith.constant 0 : index
    %c0_12 = arith.constant 0 : index
    %16 = vector.load %arg6[%c0_11, %c0_12] : memref<16x256xf32, #tpu.memory_space<vmem>>, vector<16x128xf32>
    tpu.vector_store %arg6[%c0_11, %c0_12], %15 {strides = array<i32>} : memref<16x256xf32, #tpu.memory_space<vmem>>, vector<16x128xf32>,
    %17 = vector.extract_strided_slice %8 {offsets = [0, 128], sizes = [16, 128], strides = [1, 1]} : vector<16x256xf32> to vector<16x128xf32>
    %c0_13 = arith.constant 0 : index
    %c128 = arith.constant 128 : index
    %18 = vector.load %arg6[%c0_13, %c128] : memref<16x256xf32, #tpu.memory_space<vmem>>, vector<16x128xf32>
    tpu.vector_store %arg6[%c0_13, %c128], %17 {strides = array<i32>} : memref<16x256xf32, #tpu.memory_space<vmem>>, vector<16x128xf32>,
    return
  }
  func.func @transform_0(%arg0: i32) -> (i32, i32) {
    %c0_i32 = arith.constant 0 : i32
    %c0_i32_0 = arith.constant 0 : i32
    return %arg0, %c0_i32 : i32, i32
  }
  func.func @transform_1(%arg0: i32) -> (i32, i32) {
    %c0_i32 = arith.constant 0 : i32
    %c0_i32_0 = arith.constant 0 : i32
    %c0_i32_1 = arith.constant 0 : i32
    return %c0_i32, %c0_i32_0 : i32, i32
  }
  func.func @transform_2(%arg0: i32) -> (i32, i32) {
    %c0_i32 = arith.constant 0 : i32
    %c0_i32_0 = arith.constant 0 : i32
    %c0_i32_1 = arith.constant 0 : i32
    return %c0_i32, %c0_i32_0 : i32, i32
  }
  func.func @transform_3(%arg0: i32) -> (i32, i32) {
    %c0_i32 = arith.constant 0 : i32
    %c0_i32_0 = arith.constant 0 : i32
    %c0_i32_1 = arith.constant 0 : i32
    return %c0_i32, %c0_i32_0 : i32, i32
  }
  func.func @transform_4(%arg0: i32) -> (i32, i32) {
    %c0_i32 = arith.constant 0 : i32
    %c0_i32_0 = arith.constant 0 : i32
    %c0_i32_1 = arith.constant 0 : i32
    return %c0_i32, %c0_i32_0 : i32, i32
  }
  func.func @transform_5(%arg0: i32) -> (i32, i32) {
    %c0_i32 = arith.constant 0 : i32
    %c0_i32_0 = arith.constant 0 : i32
    return %arg0, %c0_i32 : i32, i32
  }
}

</mosaic_0001>

<llo_original>
// kernel: tpu_custom_call.1
$region0: #{tpu_custom_call.1}
  #allocation0 [shape = 'u32[]', space=smem, size = 0x4, offset = 0x4, fixed_abs, tag = 'smem constant byte address 0x4 - core index']
  #allocation1 [shape = 'u32[144,128]{1,0:T(1,128)}', space=vmem, size = 0x12000, scoped, tag = 'internal scratch']
  %s0 = inlined_call_operand.hbm [shape: f32[16,32], index: 0, kind: input, shape index: {}]
  %s1 = inlined_call_operand.hbm [shape: bf16[32,256], index: 1, kind: input, shape index: {}]
  %s2 = inlined_call_operand.vmem [shape: f32[1,256], index: 2, kind: input, shape index: {}]
  %s3 = inlined_call_operand.hbm [shape: bf16[128,128], index: 3, kind: input, shape index: {}]
  %s4 = inlined_call_operand.vmem [shape: f32[1,128], index: 4, kind: input, shape index: {}]
  %s5 = inlined_call_operand.hbm [shape: f32[16,256], index: 5, kind: output, shape index: {}]
  %s6 = sld [smem:[#allocation0]]
  $region42: #{tpu_custom_call.1} parent=0
    _
  %s8 = ssub.s32 1, %s6
  %s9 = scalar_select 0, %s8, %s6
  $region1: #{tpu_custom_call.1} parent=0
    #allocation2 [shape = 'u8[8192]{0}', space=vmem, size = 0x2000, scoped, tag = 'input window, operand 0, single buffered']
    #allocation3 [shape = 's32[1]{0}', space=sflag, size = 0x4, scoped, tag = 'scoped memory for tpu_custom_call.1']
    #allocation4 [shape = 's32[1]{0}', space=sflag, size = 0x4, scoped, tag = 'scoped memory for tpu_custom_call.1']
    #allocation5 [shape = 'u8[16384]{0}', space=vmem, size = 0x4000, scoped, tag = 'input window, operand 1, single buffered']
    #allocation6 [shape = 's32[1]{0}', space=sflag, size = 0x4, scoped, tag = 'scoped memory for tpu_custom_call.1']
    #allocation7 [shape = 'u8[32768]{0}', space=vmem, size = 0x8000, scoped, tag = 'input window, operand 3, single buffered']
    #allocation8 [shape = 'u8[16384]{0}', space=vmem, size = 0x4000, scoped, tag = 'output window, operand 0, single buffered']
    %10 = vsyncpa [#allocation3], 0
    %11 = vsyncpa [#allocation6], 0
    %12 = vsyncpa [#allocation4], 0
    // Predicated region
    $region2: #{tpu_custom_call.1} parent=1 // pred_check
      _
    $region3: #{tpu_custom_call.1} parent=1 // pred_check_branch
      %14 = sbr.rel (0) target = $region5
    $region4: #{tpu_custom_call.1} parent=1 // pred_region
      %s16 = ssub.s32 256, 256
      %17 = vsyncadd [#allocation3], %s16
      %s18 = sshll.u32 [#allocation2], 4
      %s19 = int_to_ptr.vmem [resolvable:$true] %s18
      %24 = dma.hbm_to_vmem [thread:$0]  %s0, 256, %s19, [#allocation3], 128, 128, 8
    $region5: #{tpu_custom_call.1} parent=1 // pred_fallthru
      _
    // Predicated region
    $region6: #{tpu_custom_call.1} parent=1 // pred_check
      _
    $region7: #{tpu_custom_call.1} parent=1 // pred_check_branch
      %26 = sbr.rel (0) target = $region9
    $region8: #{tpu_custom_call.1} parent=1 // pred_region
      %s28 = ssub.s32 512, 512
      %29 = vsyncadd [#allocation6], %s28
      %s30 = sshll.u32 [#allocation5], 4
      %s31 = int_to_ptr.vmem [resolvable:$true] %s30
      %36 = dma.hbm_to_vmem [thread:$0]  %s1, 512, %s31, [#allocation6], 128, 128, 8
    $region9: #{tpu_custom_call.1} parent=1 // pred_fallthru
      _
    // Predicated region
    $region10: #{tpu_custom_call.1} parent=1 // pred_check
      _
    $region11: #{tpu_custom_call.1} parent=1 // pred_check_branch
      %38 = sbr.rel (0) target = $region13
    $region12: #{tpu_custom_call.1} parent=1 // pred_region
      _
    $region13: #{tpu_custom_call.1} parent=1 // pred_fallthru
      _
    // Predicated region
    $region14: #{tpu_custom_call.1} parent=1 // pred_check
      _
    $region15: #{tpu_custom_call.1} parent=1 // pred_check_branch
      %40 = sbr.rel (0) target = $region17
    $region16: #{tpu_custom_call.1} parent=1 // pred_region
      %s42 = ssub.s32 1024, 1024
      %43 = vsyncadd [#allocation6], %s42
      %s44 = sshll.u32 [#allocation7], 4
      %s45 = int_to_ptr.vmem [resolvable:$true] %s44
      %50 = dma.hbm_to_vmem [thread:$0]  %s3, 1024, %s45, [#allocation6], 64, 64, 4
    $region17: #{tpu_custom_call.1} parent=1 // pred_fallthru
      _
    // Predicated region
    $region18: #{tpu_custom_call.1} parent=1 // pred_check
      _
    $region19: #{tpu_custom_call.1} parent=1 // pred_check_branch
      %52 = sbr.rel (0) target = $region21
    $region20: #{tpu_custom_call.1} parent=1 // pred_region
      _
    $region21: #{tpu_custom_call.1} parent=1 // pred_fallthru
      _
    // Predicated region
    $region22: #{tpu_custom_call.1} parent=1 // pred_check
      _
    $region23: #{tpu_custom_call.1} parent=1 // pred_check_branch
      %54 = sbr.rel (0) target = $region25
    $region24: #{tpu_custom_call.1} parent=1 // pred_region
      %55 = dma.done [#allocation3], 256
    $region25: #{tpu_custom_call.1} parent=1 // pred_fallthru
      _
    // Predicated region
    $region26: #{tpu_custom_call.1} parent=1 // pred_check
      _
    $region27: #{tpu_custom_call.1} parent=1 // pred_check_branch
      %57 = sbr.rel (0) target = $region29
    $region28: #{tpu_custom_call.1} parent=1 // pred_region
      %58 = dma.done [#allocation6], 512
    $region29: #{tpu_custom_call.1} parent=1 // pred_fallthru
      _
    // Predicated region
    $region30: #{tpu_custom_call.1} parent=1 // pred_check
      _
    $region31: #{tpu_custom_call.1} parent=1 // pred_check_branch
      %60 = sbr.rel (0) target = $region33
    $region32: #{tpu_custom_call.1} parent=1 // pred_region
      %61 = dma.done [#allocation6], 1024
    $region33: #{tpu_custom_call.1} parent=1 // pred_fallthru
      _
    %v63 = vld [vmem:[#allocation2] sm:$0xff]
    %v64 = vld [vmem:[#allocation2 + $0x8] sm:$0xff]
    %v65 = vpack.c.bf16 %v64, %v63
    %v66 = vld [vmem:[#allocation5] sm:$0xff]
    %v67 = vld [vmem:[#allocation5 + $0x8] sm:$0xff]
    %v68 = vld [vmem:[#allocation5 + $0x10] sm:$0xff]
    %v69 = vld [vmem:[#allocation5 + $0x18] sm:$0xff]
    %v70 = vld [vmem:[%s2] sm:$0x3]
    %v72 = vlaneseq
    %v73 = vshrl.u32 %v72, 7
    %v74 = vsub.s32 0, %v73
    %v75 = vrot.slane %v70, %v74
    %v76 = vlaneseq
    %v77 = vshrl.u32 %v76, 7
    %v78 = vsub.s32 1, %v77
    %v79 = vrot.slane %v70, %v78
    %v86 = vunpack.c.l.b16 %v66
    %v87 = vunpack.c.h.b16 %v66
    %v88 = vunpack.c.l.b16 %v67
    %v89 = vunpack.c.h.b16 %v67
    %v90 = vunpack.c.l.b16 %v68
    %v91 = vunpack.c.h.b16 %v68
    %v92 = vunpack.c.l.b16 %v69
    %v93 = vunpack.c.h.b16 %v69
    %v94 = vpack.c.b16 %v88, %v86
    %v95 = vpack.c.b16 %v89, %v87
    %v96 = vpack.c.b16 %v92, %v90
    %v97 = vpack.c.b16 %v93, %v91
    %vm102 = vcmask 261120
    %v104 = vsel %vm102, %v65, 0
    %106 = vmatprep.subr.bf16.mxu0 %v95
    %107 = vmatpush1.bf16.msra.mxu0 %v94
    %108 = vmatprep.subr.bf16.mxu0 %v97
    %109 = vmatpush1.bf16.msra.mxu0 %v96
    %110 = vmatprep.subr.bf16.mxu0 0
    %111 = vmatpush1.bf16.msra.mxu0 0
    %112 = vmatprep.subr.bf16.mxu0 0
    %113 = vmatpush1.bf16.msra.mxu0 0
    %114 = vmatprep.subr.bf16.mxu0 0
    %115 = vmatpush1.bf16.msra.mxu0 0
    %116 = vmatprep.subr.bf16.mxu0 0
    %117 = vmatpush1.bf16.msra.mxu0 0
    %118 = vmatprep.subr.bf16.mxu0 0
    %119 = vmatpush1.bf16.msra.mxu0 0
    %120 = vmatprep.subr.bf16.mxu0 0
    %121 = vmatpush1.bf16.msra.mxu0 0
    %122 = vmatprep.subr.bf16.mxu0 0
    %123 = vmatpush1.bf16.msra.mxu0 0
    %124 = vmatprep.subr.bf16.mxu0 0
    %125 = vmatpush1.bf16.msra.mxu0 0
    %126 = vmatprep.subr.bf16.mxu0 0
    %127 = vmatpush1.bf16.msra.mxu0 0
    %128 = vmatprep.subr.bf16.mxu0 0
    %129 = vmatpush1.bf16.msra.mxu0 0
    %130 = vmatprep.subr.bf16.mxu0 0
    %131 = vmatpush1.bf16.msra.mxu0 0
    %132 = vmatprep.subr.bf16.mxu0 0
    %133 = vmatpush1.bf16.msra.mxu0 0
    %134 = vmatprep.subr.bf16.mxu0 0
    %135 = vmatpush1.bf16.msra.mxu0 0
    %136 = vmatprep.subr.bf16.mxu0 0
    %137 = vmatpush1.bf16.msra.mxu0 0
    %138 = vmatprep.mubr.bf16.mxu0 0
    %139 = vmatmul.mubr.bf16.gmra.mrb[0].mxu0 %v104
    %v140 = vpop.f32.mrb[0].mxu0
    %v141 = vadd.f32 %v75, %v140
    %v142 = vpop.f32.mrb[0].mxu0
    %v143 = vadd.f32 %v79, %v142
    %v144 = vpop.f32.mrb[0].mxu0
    %v145 = vadd.f32 %v75, %v144
    %v146 = vpop.f32.mrb[0].mxu0
    %v147 = vadd.f32 %v79, %v146
    %148 = vdwg.mxu0
    %v149 = vmax.f32 %v141, 0.0
    %v150 = vmax.f32 %v143, 0.0
    %v151 = vmax.f32 %v145, 0.0
    %v152 = vmax.f32 %v147, 0.0
    %v153 = vpack.c.bf16 %v151, %v149
    %v154 = vld [vmem:[#allocation7] sm:$0xf]
    %v155 = vld [vmem:[#allocation7 + $0x4] sm:$0xf]
    %v156 = vld [vmem:[#allocation7 + $0x8] sm:$0xf]
    %v157 = vld [vmem:[#allocation7 + $0xc] sm:$0xf]
    %v158 = vld [vmem:[#allocation7 + $0x10] sm:$0xf]
    %v159 = vld [vmem:[#allocation7 + $0x14] sm:$0xf]
    %v160 = vld [vmem:[#allocation7 + $0x18] sm:$0xf]
    %v161 = vld [vmem:[#allocation7 + $0x1c] sm:$0xf]
    %v162 = vld [vmem:[#allocation7 + $0x20] sm:$0xf]
    %v163 = vld [vmem:[#allocation7 + $0x24] sm:$0xf]
    %v164 = vld [vmem:[#allocation7 + $0x28] sm:$0xf]
    %v165 = vld [vmem:[#allocation7 + $0x2c] sm:$0xf]
    %v166 = vld [vmem:[#allocation7 + $0x30] sm:$0xf]
    %v167 = vld [vmem:[#allocation7 + $0x34] sm:$0xf]
    %v168 = vld [vmem:[#allocation7 + $0x38] sm:$0xf]
    %v169 = vld [vmem:[#allocation7 + $0x3c] sm:$0xf]
    %v170 = vld [vmem:[%s4] sm:$0x1]
    %v172 = vlaneseq
    %v173 = vshrl.u32 %v172, 7
    %v174 = vsub.s32 0, %v173
    %v175 = vrot.slane %v170, %v174
    %v193 = vunpack.c.l.b16 %v154
    %v194 = vunpack.c.l.b16 %v155
    %v195 = vunpack.c.l.b16 %v156
    %v196 = vunpack.c.l.b16 %v157
    %v197 = vunpack.c.l.b16 %v158
    %v198 = vunpack.c.l.b16 %v159
    %v199 = vunpack.c.l.b16 %v160
    %v200 = vunpack.c.l.b16 %v161
    %v201 = vunpack.c.l.b16 %v162
    %v202 = vunpack.c.l.b16 %v163
    %v203 = vunpack.c.l.b16 %v164
    %v204 = vunpack.c.l.b16 %v165
    %v205 = vunpack.c.l.b16 %v166
    %v206 = vunpack.c.l.b16 %v167
    %v207 = vunpack.c.l.b16 %v168
    %v208 = vunpack.c.l.b16 %v169
    %v209 = vpack.c.b16 %v194, %v193
    %v210 = vpack.c.b16 %v196, %v195
    %v211 = vpack.c.b16 %v198, %v197
    %v212 = vpack.c.b16 %v200, %v199
    %v213 = vpack.c.b16 %v202, %v201
    %v214 = vpack.c.b16 %v204, %v203
    %v215 = vpack.c.b16 %v206, %v205
    %v216 = vpack.c.b16 %v208, %v207
    %225 = vmatprep.subr.bf16.mxu0 0
    %226 = vmatpush1.bf16.msra.mxu0 %v209
    %227 = vmatprep.subr.bf16.mxu0 0
    %228 = vmatpush1.bf16.msra.mxu0 %v210
    %229 = vmatprep.subr.bf16.mxu0 0
    %230 = vmatpush1.bf16.msra.mxu0 %v211
    %231 = vmatprep.subr.bf16.mxu0 0
    %232 = vmatpush1.bf16.msra.mxu0 %v212
    %233 = vmatprep.subr.bf16.mxu0 0
    %234 = vmatpush1.bf16.msra.mxu0 %v213
    %235 = vmatprep.subr.bf16.mxu0 0
    %236 = vmatpush1.bf16.msra.mxu0 %v214
    %237 = vmatprep.subr.bf16.mxu0 0
    %238 = vmatpush1.bf16.msra.mxu0 %v215
    %239 = vmatprep.subr.bf16.mxu0 0
    %240 = vmatpush1.bf16.msra.mxu0 %v216
    %241 = vmatprep.subr.bf16.mxu0 0
    %242 = vmatpush1.bf16.msra.mxu0 0
    %243 = vmatprep.subr.bf16.mxu0 0
    %244 = vmatpush1.bf16.msra.mxu0 0
    %245 = vmatprep.subr.bf16.mxu0 0
    %246 = vmatpush1.bf16.msra.mxu0 0
    %247 = vmatprep.subr.bf16.mxu0 0
    %248 = vmatpush1.bf16.msra.mxu0 0
    %249 = vmatprep.subr.bf16.mxu0 0
    %250 = vmatpush1.bf16.msra.mxu0 0
    %251 = vmatprep.subr.bf16.mxu0 0
    %252 = vmatpush1.bf16.msra.mxu0 0
    %253 = vmatprep.subr.bf16.mxu0 0
    %254 = vmatpush1.bf16.msra.mxu0 0
    %255 = vmatprep.subr.bf16.mxu0 0
    %256 = vmatpush1.bf16.msra.mxu0 0
    %257 = vmatprep.mubr.bf16.mxu0 0
    %258 = vmatmul.mubr.bf16.gmra.mrb[0].mxu0 %v153
    %v259 = vpop.f32.mrb[0].mxu0
    %v260 = vadd.f32 %v175, %v259
    %v261 = vpop.f32.mrb[0].mxu0
    %v262 = vpop.f32.mrb[0].mxu0
    %v263 = vadd.f32 %v175, %v262
    %v264 = vpop.f32.mrb[0].mxu0
    %265 = vdwg.mxu0
    %266 = vst [vmem:[#allocation8] sm:$0xff] %v260
    %267 = vst [vmem:[#allocation8 + $0x10] sm:$0xff] %v263
    %268 = vst [vmem:[#allocation8 + $0x8] sm:$0xff] %v150
    %269 = vst [vmem:[#allocation8 + $0x18] sm:$0xff] %v152
    // Predicated region
    $region34: #{tpu_custom_call.1} parent=1 // pred_check
      _
    $region35: #{tpu_custom_call.1} parent=1 // pred_check_branch
      %271 = sbr.rel (0) target = $region37
    $region36: #{tpu_custom_call.1} parent=1 // pred_region
      %s273 = ssub.s32 512, 512
      %274 = vsyncadd [#allocation4], %s273
      %s275 = sshll.u32 [#allocation8], 4
      %s276 = int_to_ptr.vmem [resolvable:$true] %s275
      %281 = dma.vmem_to_hbm [thread:$0]  %s276, 512, %s5, [#allocation4], 256, 256, 16
    $region37: #{tpu_custom_call.1} parent=1 // pred_fallthru
      _
    // Predicated region
    $region38: #{tpu_custom_call.1} parent=1 // pred_check
      _
    $region39: #{tpu_custom_call.1} parent=1 // pred_check_branch
      %283 = sbr.rel (0) target = $region41
    $region40: #{tpu_custom_call.1} parent=1 // pred_region
      %284 = dma.done [#allocation4], 512
    $region41: #{tpu_custom_call.1} parent=1 // pred_fallthru
      _
    %285 = vsyncpa [#allocation3], 1
    %286 = vsyncpa [#allocation6], 1
    %287 = vsyncpa [#allocation4], 1

// kernel: tpu_custom_call.1
$region0: #{tpu_custom_call.1}
  #allocation0 [shape = 'u32[]', space=smem, size = 0x4, offset = 0x4, fixed_abs, tag = 'smem constant byte address 0x4 - core index']
  #allocation1 [shape = 'u32[144,128]{1,0:T(1,128)}', space=vmem, size = 0x12000, scoped, tag = 'internal scratch']
  %s0 = inlined_call_operand.hbm [shape: f32[16,32], index: 0, kind: input, shape index: {}]
  %s1 = inlined_call_operand.hbm [shape: bf16[32,256], index: 1, kind: input, shape index: {}]
  %s2 = inlined_call_operand.vmem [shape: f32[1,256], index: 2, kind: input, shape index: {}]
  %s3 = inlined_call_operand.hbm [shape: bf16[128,128], index: 3, kind: input, shape index: {}]
  %s4 = inlined_call_operand.vmem [shape: f32[1,128], index: 4, kind: input, shape index: {}]
  %s5 = inlined_call_operand.hbm [shape: f32[16,256], index: 5, kind: output, shape index: {}]
  %s6 = sld [smem:[#allocation0]]
  $region42: #{tpu_custom_call.1} parent=0
    _
  %s8 = ssub.s32 1, %s6
  %s9 = scalar_select 0, %s8, %s6
  $region1: #{tpu_custom_call.1} parent=0
    #allocation2 [shape = 'u8[8192]{0}', space=vmem, size = 0x2000, scoped, tag = 'input window, operand 0, single buffered']
    #allocation3 [shape = 's32[1]{0}', space=sflag, size = 0x4, scoped, tag = 'scoped memory for tpu_custom_call.1']
    #allocation4 [shape = 's32[1]{0}', space=sflag, size = 0x4, scoped, tag = 'scoped memory for tpu_custom_call.1']
    #allocation5 [shape = 'u8[16384]{0}', space=vmem, size = 0x4000, scoped, tag = 'input window, operand 1, single buffered']
    #allocation6 [shape = 's32[1]{0}', space=sflag, size = 0x4, scoped, tag = 'scoped memory for tpu_custom_call.1']
    #allocation7 [shape = 'u8[32768]{0}', space=vmem, size = 0x8000, scoped, tag = 'input window, operand 3, single buffered']
    #allocation8 [shape = 'u8[16384]{0}', space=vmem, size = 0x4000, scoped, tag = 'output window, operand 0, single buffered']
    %10 = vsyncpa [#allocation3], 0
    %11 = vsyncpa [#allocation6], 0
    %12 = vsyncpa [#allocation4], 0
    // Predicated region
    $region2: #{tpu_custom_call.1} parent=1 // pred_check
      _
    $region3: #{tpu_custom_call.1} parent=1 // pred_check_branch
      %14 = sbr.rel (0) target = $region5
    $region4: #{tpu_custom_call.1} parent=1 // pred_region
      %s16 = ssub.s32 256, 256
      %17 = vsyncadd [#allocation3], %s16
      %s18 = sshll.u32 [#allocation2], 4
      %s19 = int_to_ptr.vmem [resolvable:$true] %s18
      %24 = dma.hbm_to_vmem [thread:$0]  %s0, 256, %s19, [#allocation3], 128, 128, 8
    $region5: #{tpu_custom_call.1} parent=1 // pred_fallthru
      _
    // Predicated region
    $region6: #{tpu_custom_call.1} parent=1 // pred_check
      _
    $region7: #{tpu_custom_call.1} parent=1 // pred_check_branch
      %26 = sbr.rel (0) target = $region9
    $region8: #{tpu_custom_call.1} parent=1 // pred_region
      %s28 = ssub.s32 512, 512
      %29 = vsyncadd [#allocation6], %s28
      %s30 = sshll.u32 [#allocation5], 4
      %s31 = int_to_ptr.vmem [resolvable:$true] %s30
      %36 = dma.hbm_to_vmem [thread:$0]  %s1, 512, %s31, [#allocation6], 128, 128, 8
    $region9: #{tpu_custom_call.1} parent=1 // pred_fallthru
      _
    // Predicated region
    $region10: #{tpu_custom_call.1} parent=1 // pred_check
      _
    $region11: #{tpu_custom_call.1} parent=1 // pred_check_branch
      %38 = sbr.rel (0) target = $region13
    $region12: #{tpu_custom_call.1} parent=1 // pred_region
      _
    $region13: #{tpu_custom_call.1} parent=1 // pred_fallthru
      _
    // Predicated region
    $region14: #{tpu_custom_call.1} parent=1 // pred_check
      _
    $region15: #{tpu_custom_call.1} parent=1 // pred_check_branch
      %40 = sbr.rel (0) target = $region17
    $region16: #{tpu_custom_call.1} parent=1 // pred_region
      %s42 = ssub.s32 1024, 1024
      %43 = vsyncadd [#allocation6], %s42
      %s44 = sshll.u32 [#allocation7], 4
      %s45 = int_to_ptr.vmem [resolvable:$true] %s44
      %50 = dma.hbm_to_vmem [thread:$0]  %s3, 1024, %s45, [#allocation6], 64, 64, 4
    $region17: #{tpu_custom_call.1} parent=1 // pred_fallthru
      _
    // Predicated region
    $region18: #{tpu_custom_call.1} parent=1 // pred_check
      _
    $region19: #{tpu_custom_call.1} parent=1 // pred_check_branch
      %52 = sbr.rel (0) target = $region21
    $region20: #{tpu_custom_call.1} parent=1 // pred_region
      _
    $region21: #{tpu_custom_call.1} parent=1 // pred_fallthru
      _
    // Predicated region
    $region22: #{tpu_custom_call.1} parent=1 // pred_check
      _
    $region23: #{tpu_custom_call.1} parent=1 // pred_check_branch
      %54 = sbr.rel (0) target = $region25
    $region24: #{tpu_custom_call.1} parent=1 // pred_region
      %55 = dma.done [#allocation3], 256
    $region25: #{tpu_custom_call.1} parent=1 // pred_fallthru
      _
    // Predicated region
    $region26: #{tpu_custom_call.1} parent=1 // pred_check
      _
    $region27: #{tpu_custom_call.1} parent=1 // pred_check_branch
      %57 = sbr.rel (0) target = $region29
    $region28: #{tpu_custom_call.1} parent=1 // pred_region
      %58 = dma.done [#allocation6], 512
    $region29: #{tpu_custom_call.1} parent=1 // pred_fallthru
      _
    // Predicated region
    $region30: #{tpu_custom_call.1} parent=1 // pred_check
      _
    $region31: #{tpu_custom_call.1} parent=1 // pred_check_branch
      %60 = sbr.rel (0) target = $region33
    $region32: #{tpu_custom_call.1} parent=1 // pred_region
      %61 = dma.done [#allocation6], 1024
    $region33: #{tpu_custom_call.1} parent=1 // pred_fallthru
      _
    %v63 = vld [vmem:[#allocation2] sm:$0xff]
    %v64 = vld [vmem:[#allocation2 + $0x8] sm:$0xff]
    %v65 = vpack.c.bf16 %v64, %v63
    %v66 = vld [vmem:[#allocation5] sm:$0xff]
    %v67 = vld [vmem:[#allocation5 + $0x8] sm:$0xff]
    %v68 = vld [vmem:[#allocation5 + $0x10] sm:$0xff]
    %v69 = vld [vmem:[#allocation5 + $0x18] sm:$0xff]
    %v70 = vld [vmem:[%s2] sm:$0x3]
    %v72 = vlaneseq
    %v73 = vshrl.u32 %v72, 7
    %v74 = vsub.s32 0, %v73
    %v75 = vrot.slane %v70, %v74
    %v76 = vlaneseq
    %v77 = vshrl.u32 %v76, 7
    %v78 = vsub.s32 1, %v77
    %v79 = vrot.slane %v70, %v78
    %v86 = vunpack.c.l.b16 %v66
    %v87 = vunpack.c.h.b16 %v66
    %v88 = vunpack.c.l.b16 %v67
    %v89 = vunpack.c.h.b16 %v67
    %v90 = vunpack.c.l.b16 %v68
    %v91 = vunpack.c.h.b16 %v68
    %v92 = vunpack.c.l.b16 %v69
    %v93 = vunpack.c.h.b16 %v69
    %v94 = vpack.c.b16 %v88, %v86
    %v95 = vpack.c.b16 %v89, %v87
    %v96 = vpack.c.b16 %v92, %v90
    %v97 = vpack.c.b16 %v93, %v91
    %vm102 = vcmask 261120
    %v104 = vsel %vm102, %v65, 0
    %106 = vmatprep.subr.bf16.mxu0 %v95
    %107 = vmatpush1.bf16.msra.mxu0 %v94
    %108 = vmatprep.subr.bf16.mxu0 %v97
    %109 = vmatpush1.bf16.msra.mxu0 %v96
    %110 = vmatprep.subr.bf16.mxu0 0
    %111 = vmatpush1.bf16.msra.mxu0 0
    %112 = vmatprep.subr.bf16.mxu0 0
    %113 = vmatpush1.bf16.msra.mxu0 0
    %114 = vmatprep.subr.bf16.mxu0 0
    %115 = vmatpush1.bf16.msra.mxu0 0
    %116 = vmatprep.subr.bf16.mxu0 0
    %117 = vmatpush1.bf16.msra.mxu0 0
    %118 = vmatprep.subr.bf16.mxu0 0
    %119 = vmatpush1.bf16.msra.mxu0 0
    %120 = vmatprep.subr.bf16.mxu0 0
    %121 = vmatpush1.bf16.msra.mxu0 0
    %122 = vmatprep.subr.bf16.mxu0 0
    %123 = vmatpush1.bf16.msra.mxu0 0
    %124 = vmatprep.subr.bf16.mxu0 0
    %125 = vmatpush1.bf16.msra.mxu0 0
    %126 = vmatprep.subr.bf16.mxu0 0
    %127 = vmatpush1.bf16.msra.mxu0 0
    %128 = vmatprep.subr.bf16.mxu0 0
    %129 = vmatpush1.bf16.msra.mxu0 0
    %130 = vmatprep.subr.bf16.mxu0 0
    %131 = vmatpush1.bf16.msra.mxu0 0
    %132 = vmatprep.subr.bf16.mxu0 0
    %133 = vmatpush1.bf16.msra.mxu0 0
    %134 = vmatprep.subr.bf16.mxu0 0
    %135 = vmatpush1.bf16.msra.mxu0 0
    %136 = vmatprep.subr.bf16.mxu0 0
    %137 = vmatpush1.bf16.msra.mxu0 0
    %138 = vmatprep.mubr.bf16.mxu0 0
    %139 = vmatmul.mubr.bf16.gmra.mrb[0].mxu0 %v104
    %v140 = vpop.f32.mrb[0].mxu0
    %v141 = vadd.f32 %v75, %v140
    %v142 = vpop.f32.mrb[0].mxu0
    %v143 = vadd.f32 %v79, %v142
    %v144 = vpop.f32.mrb[0].mxu0
    %v145 = vadd.f32 %v75, %v144
    %v146 = vpop.f32.mrb[0].mxu0
    %v147 = vadd.f32 %v79, %v146
    %148 = vdwg.mxu0
    %v149 = vmax.f32 %v141, 0.0
    %v150 = vmax.f32 %v143, 0.0
    %v151 = vmax.f32 %v145, 0.0
    %v152 = vmax.f32 %v147, 0.0
    %v153 = vpack.c.bf16 %v151, %v149
    %v154 = vld [vmem:[#allocation7] sm:$0xf]
    %v155 = vld [vmem:[#allocation7 + $0x4] sm:$0xf]
    %v156 = vld [vmem:[#allocation7 + $0x8] sm:$0xf]
    %v157 = vld [vmem:[#allocation7 + $0xc] sm:$0xf]
    %v158 = vld [vmem:[#allocation7 + $0x10] sm:$0xf]
    %v159 = vld [vmem:[#allocation7 + $0x14] sm:$0xf]
    %v160 = vld [vmem:[#allocation7 + $0x18] sm:$0xf]
    %v161 = vld [vmem:[#allocation7 + $0x1c] sm:$0xf]
    %v162 = vld [vmem:[#allocation7 + $0x20] sm:$0xf]
    %v163 = vld [vmem:[#allocation7 + $0x24] sm:$0xf]
    %v164 = vld [vmem:[#allocation7 + $0x28] sm:$0xf]
    %v165 = vld [vmem:[#allocation7 + $0x2c] sm:$0xf]
    %v166 = vld [vmem:[#allocation7 + $0x30] sm:$0xf]
    %v167 = vld [vmem:[#allocation7 + $0x34] sm:$0xf]
    %v168 = vld [vmem:[#allocation7 + $0x38] sm:$0xf]
    %v169 = vld [vmem:[#allocation7 + $0x3c] sm:$0xf]
    %v170 = vld [vmem:[%s4] sm:$0x1]
    %v172 = vlaneseq
    %v173 = vshrl.u32 %v172, 7
    %v174 = vsub.s32 0, %v173
    %v175 = vrot.slane %v170, %v174
    %v193 = vunpack.c.l.b16 %v154
    %v194 = vunpack.c.l.b16 %v155
    %v195 = vunpack.c.l.b16 %v156
    %v196 = vunpack.c.l.b16 %v157
    %v197 = vunpack.c.l.b16 %v158
    %v198 = vunpack.c.l.b16 %v159
    %v199 = vunpack.c.l.b16 %v160
    %v200 = vunpack.c.l.b16 %v161
    %v201 = vunpack.c.l.b16 %v162
    %v202 = vunpack.c.l.b16 %v163
    %v203 = vunpack.c.l.b16 %v164
    %v204 = vunpack.c.l.b16 %v165
    %v205 = vunpack.c.l.b16 %v166
    %v206 = vunpack.c.l.b16 %v167
    %v207 = vunpack.c.l.b16 %v168
    %v208 = vunpack.c.l.b16 %v169
    %v209 = vpack.c.b16 %v194, %v193
    %v210 = vpack.c.b16 %v196, %v195
    %v211 = vpack.c.b16 %v198, %v197
    %v212 = vpack.c.b16 %v200, %v199
    %v213 = vpack.c.b16 %v202, %v201
    %v214 = vpack.c.b16 %v204, %v203
    %v215 = vpack.c.b16 %v206, %v205
    %v216 = vpack.c.b16 %v208, %v207
    %225 = vmatprep.subr.bf16.mxu0 0
    %226 = vmatpush1.bf16.msra.mxu0 %v209
    %227 = vmatprep.subr.bf16.mxu0 0
    %228 = vmatpush1.bf16.msra.mxu0 %v210
    %229 = vmatprep.subr.bf16.mxu0 0
    %230 = vmatpush1.bf16.msra.mxu0 %v211
    %231 = vmatprep.subr.bf16.mxu0 0
    %232 = vmatpush1.bf16.msra.mxu0 %v212
    %233 = vmatprep.subr.bf16.mxu0 0
    %234 = vmatpush1.bf16.msra.mxu0 %v213
    %235 = vmatprep.subr.bf16.mxu0 0
    %236 = vmatpush1.bf16.msra.mxu0 %v214
    %237 = vmatprep.subr.bf16.mxu0 0
    %238 = vmatpush1.bf16.msra.mxu0 %v215
    %239 = vmatprep.subr.bf16.mxu0 0
    %240 = vmatpush1.bf16.msra.mxu0 %v216
    %241 = vmatprep.subr.bf16.mxu0 0
    %242 = vmatpush1.bf16.msra.mxu0 0
    %243 = vmatprep.subr.bf16.mxu0 0
    %244 = vmatpush1.bf16.msra.mxu0 0
    %245 = vmatprep.subr.bf16.mxu0 0
    %246 = vmatpush1.bf16.msra.mxu0 0
    %247 = vmatprep.subr.bf16.mxu0 0
    %248 = vmatpush1.bf16.msra.mxu0 0
    %249 = vmatprep.subr.bf16.mxu0 0
    %250 = vmatpush1.bf16.msra.mxu0 0
    %251 = vmatprep.subr.bf16.mxu0 0
    %252 = vmatpush1.bf16.msra.mxu0 0
    %253 = vmatprep.subr.bf16.mxu0 0
    %254 = vmatpush1.bf16.msra.mxu0 0
    %255 = vmatprep.subr.bf16.mxu0 0
    %256 = vmatpush1.bf16.msra.mxu0 0
    %257 = vmatprep.mubr.bf16.mxu0 0
    %258 = vmatmul.mubr.bf16.gmra.mrb[0].mxu0 %v153
    %v259 = vpop.f32.mrb[0].mxu0
    %v260 = vadd.f32 %v175, %v259
    %v261 = vpop.f32.mrb[0].mxu0
    %v262 = vpop.f32.mrb[0].mxu0
    %v263 = vadd.f32 %v175, %v262
    %v264 = vpop.f32.mrb[0].mxu0
    %265 = vdwg.mxu0
    %266 = vst [vmem:[#allocation8] sm:$0xff] %v260
    %267 = vst [vmem:[#allocation8 + $0x10] sm:$0xff] %v263
    %268 = vst [vmem:[#allocation8 + $0x8] sm:$0xff] %v150
    %269 = vst [vmem:[#allocation8 + $0x18] sm:$0xff] %v152
    // Predicated region
    $region34: #{tpu_custom_call.1} parent=1 // pred_check
      _
    $region35: #{tpu_custom_call.1} parent=1 // pred_check_branch
      %271 = sbr.rel (0) target = $region37
    $region36: #{tpu_custom_call.1} parent=1 // pred_region
      %s273 = ssub.s32 512, 512
      %274 = vsyncadd [#allocation4], %s273
      %s275 = sshll.u32 [#allocation8], 4
      %s276 = int_to_ptr.vmem [resolvable:$true] %s275
      %281 = dma.vmem_to_hbm [thread:$0]  %s276, 512, %s5, [#allocation4], 256, 256, 16
    $region37: #{tpu_custom_call.1} parent=1 // pred_fallthru
      _
    // Predicated region
    $region38: #{tpu_custom_call.1} parent=1 // pred_check
      _
    $region39: #{tpu_custom_call.1} parent=1 // pred_check_branch
      %283 = sbr.rel (0) target = $region41
    $region40: #{tpu_custom_call.1} parent=1 // pred_region
      %284 = dma.done [#allocation4], 512
    $region41: #{tpu_custom_call.1} parent=1 // pred_fallthru
      _
    %285 = vsyncpa [#allocation3], 1
    %286 = vsyncpa [#allocation6], 1
    %287 = vsyncpa [#allocation4], 1

</llo_original>
